<compile_context>
chip_gen: v5e
topology: v5e:2x2
jax: 0.10.0
libtpu: 0.0.40
codegen_flags: <defaults>
</compile_context>

<pallas_src>
import functools

import jax
import jax.numpy as jnp
from jax import lax
from jax.experimental import pallas as pl
from jax.experimental.pallas import tpu as pltpu


def _round_up(x, m):
    return ((x + m - 1) // m) * m


def _pick_row_tile(n):
    # Largest row tile (multiple of 8) dividing n, capped at 512.
    for cand in (512, 256, 128, 64, 32, 16, 8):
        if n % cand == 0:
            return cand
    return n


def _pick_col_tile(n):
    # Largest lane tile (multiple of 128) dividing n, capped at 512.
    for cand in (512, 256, 128):
        if n % cand == 0:
            return cand
    return n


def _pick_batch_tile(bp):
    # Largest batch block (multiple of 8) dividing bp, capped at 64 so large
    # batches produce several "parallel" grid steps for megacore.
    for cand in (64, 32, 16, 8):
        if bp % cand == 0:
            return cand
    return bp


# ---------------------------------------------------------------------------
# K1: fused input-projection + serial recurrence over time
# ---------------------------------------------------------------------------
def _rnn_recurrence_kernel(ts_per_block, x_ref, wih_ref, whh_ref, b_ref,
                           h_ref, h_carry):
    # x_ref   : (TB, TS, E)   embedded tokens for this (batch, time) block
    # wih_ref : (E, Hp)       W_ih^T (constant across the grid)
    # whh_ref : (Hp, Hp)      W_hh^T (constant across the grid)
    # b_ref   : (1, Hp)       b_ih + b_hh
    # h_ref   : (TB, TS, Hp)  hidden states for every timestep in this block
    # h_carry : (TB, Hp)      VMEM scratch carrying h across time blocks
    @pl.when(pl.program_id(1) == 0)
    def _():
        h_carry[...] = jnp.zeros_like(h_carry)

    wih = wih_ref[...]
    whh = whh_ref[...]
    bias = b_ref[...]
    x_blk = x_ref[...]
    h = h_carry[...]
    for t in range(ts_per_block):  # static unroll over the time block
        g_t = jnp.dot(x_blk[:, t, :], wih,
                      preferred_element_type=jnp.float32) + bias
        h = jnp.tanh(g_t + jnp.dot(h, whh,
                                   preferred_element_type=jnp.float32))
        h_ref[:, t, :] = h           # lane-dense per-step store
    h_carry[...] = h


def rnn_recurrence(x, wih_t, whh_t, b_rnn, *, ts_per_block, batch_tile):
    """x: (Bp, Tp, E) -> h_all: (Bp, Tp, Hp) float32."""
    Bp, Tp, E = x.shape
    Hp = whh_t.shape[0]
    kernel = functools.partial(_rnn_recurrence_kernel, ts_per_block)
    return pl.pallas_call(
        kernel,
        out_shape=jax.ShapeDtypeStruct((Bp, Tp, Hp), jnp.float32),
        grid_spec=pltpu.PrefetchScalarGridSpec(
            num_scalar_prefetch=0,
            grid=(Bp // batch_tile, Tp // ts_per_block),
            in_specs=[
                pl.BlockSpec((batch_tile, ts_per_block, E),
                             lambda i, t: (i, t, 0)),
                pl.BlockSpec((E, Hp), lambda i, t: (0, 0)),
                pl.BlockSpec((Hp, Hp), lambda i, t: (0, 0)),
                pl.BlockSpec((1, Hp), lambda i, t: (0, 0)),
            ],
            out_specs=pl.BlockSpec((batch_tile, ts_per_block, Hp),
                                   lambda i, t: (i, t, 0)),
            scratch_shapes=[pltpu.VMEM((batch_tile, Hp), jnp.float32)],
        ),
        compiler_params=pltpu.CompilerParams(
            # batch blocks independent -> megacore; time is sequential.
            dimension_semantics=("parallel", "arbitrary")),
    )(x, wih_t, whh_t, b_rnn)


# ---------------------------------------------------------------------------
# K2: batched tiled matmul + bias (output projection, lane-dense stores)
# ---------------------------------------------------------------------------
def _matmul_bias_kernel(x_ref, w_ref, b_ref, o_ref):
    # x: (TM, K), w: (K, TN), b: (1, TN), o: (TM, TN)
    o_ref[...] = (
        jnp.dot(x_ref[...], w_ref[...], preferred_element_type=jnp.float32)
        + b_ref[...]
    )


def matmul_bias(x, w, b):
    """x: (N, K), w: (K, M), b: (1, M) -> (N, M) f32.

    N must be a multiple of 8 and M a multiple of 128 (caller pads)."""
    N, K = x.shape
    _, M = w.shape
    tm = _pick_row_tile(N)
    tn = _pick_col_tile(M)
    return pl.pallas_call(
        _matmul_bias_kernel,
        out_shape=jax.ShapeDtypeStruct((N, M), jnp.float32),
        grid_spec=pltpu.PrefetchScalarGridSpec(
            num_scalar_prefetch=0,
            grid=(N // tm, M // tn),
            in_specs=[
                pl.BlockSpec((tm, K), lambda i, j: (i, 0)),
                pl.BlockSpec((K, tn), lambda i, j: (0, j)),
                pl.BlockSpec((1, tn), lambda i, j: (0, j)),
            ],
            out_specs=pl.BlockSpec((tm, tn), lambda i, j: (i, j)),
        ),
        compiler_params=pltpu.CompilerParams(
            dimension_semantics=("parallel", "parallel")),
    )(x, w, b)


# ---------------------------------------------------------------------------
# Full forward pass (matches torch RNNModel.forward)
# ---------------------------------------------------------------------------
def rnn_forward_pallas(token_ids, params, *, ts_per_block=8):
    """token_ids: (B, T) int32. Returns logits (B, T, V) float32."""
    emb, w_ih, w_hh, b_ih, b_hh, w_fc, b_fc = (
        params["emb"], params["w_ih"], params["w_hh"], params["b_ih"],
        params["b_hh"], params["w_fc"], params["b_fc"])

    B, T = token_ids.shape
    V, E = emb.shape
    H = w_hh.shape[0]

    Bp = _round_up(B, 8)
    Tp = _round_up(T, ts_per_block)
    Hp = _round_up(H, 128)
    Vp = _round_up(V, 128)
    TB = _pick_batch_tile(Bp)

    # Zero-padded, pre-transposed weights. Padded hidden columns receive gate
    # value 0 and zero W_hh columns, so they stay exactly tanh(0) == 0 through
    # the recurrence and contribute nothing to the real outputs.
    wih_t = jnp.zeros((E, Hp), jnp.float32).at[:, :H].set(w_ih.T)
    whh_t = jnp.zeros((Hp, Hp), jnp.float32).at[:H, :H].set(w_hh.T)
    b_rnn = jnp.zeros((1, Hp), jnp.float32).at[0, :H].set(b_ih + b_hh)
    wfc_t = jnp.zeros((Hp, Vp), jnp.float32).at[:H, :V].set(w_fc.T)
    bfc = jnp.zeros((1, Vp), jnp.float32).at[0, :V].set(b_fc)

    # Embedding lookup (gather glue in plain JAX), kept batch-first.
    # TODO(synk): embedding gather could become a Pallas DMA-gather kernel,
    # but jnp.take is the right tool for this row gather.
    tok = jnp.zeros((Bp, Tp), token_ids.dtype).at[:B, :T].set(token_ids)
    x = jnp.take(emb, tok, axis=0)                        # (Bp, Tp, E)

    # K1: fused input projection + serial recurrence (gates never hit HBM).
    h_all = rnn_recurrence(x, wih_t, whh_t, b_rnn,
                           ts_per_block=ts_per_block, batch_tile=TB)

    # K2: batched, V-tiled output projection.
    logits = matmul_bias(h_all.reshape(Bp * Tp, Hp), wfc_t, bfc)  # (Bp*Tp, Vp)
    logits = logits.reshape(Bp, Tp, Vp)

    return logits[:B, :T, :V]


# ---------------------------------------------------------------------------
# Pure-JAX reference (torch semantics: tanh RNN, batch_first) and test driver
# ---------------------------------------------------------------------------
def rnn_forward_ref(token_ids, params):
    emb, w_ih, w_hh, b_ih, b_hh, w_fc, b_fc = (
        params["emb"], params["w_ih"], params["w_hh"], params["b_ih"],
        params["b_hh"], params["w_fc"], params["b_fc"])
    x = jnp.take(emb, token_ids, axis=0)                  # (B, T, E)
    B, T, E = x.shape
    H = w_hh.shape[0]

    def step(h, x_t):
        h_new = jnp.tanh(x_t @ w_ih.T + b_ih + h @ w_hh.T + b_hh)
        return h_new, h_new

    h0 = jnp.zeros((B, H), jnp.float32)
    _, hs = lax.scan(step, h0, jnp.transpose(x, (1, 0, 2)))   # (T, B, H)
    out = jnp.transpose(hs, (1, 0, 2))                        # (B, T, H)
    return out @ w_fc.T + b_fc                                # (B, T, V)


def make_params(key, vocab_size, embed_dim, hidden_dim):
    ks = jax.random.split(key, 7)
    scale = 0.1
    return {
        "emb":  scale * jax.random.normal(ks[0], (vocab_size, embed_dim), jnp.float32),
        "w_ih": scale * jax.random.normal(ks[1], (hidden_dim, embed_dim), jnp.float32),
        "w_hh": scale * jax.random.normal(ks[2], (hidden_dim, hidden_dim), jnp.float32),
        "b_ih": scale * jax.random.normal(ks[3], (hidden_dim,), jnp.float32),
        "b_hh": scale * jax.random.normal(ks[4], (hidden_dim,), jnp.float32),
        "w_fc": scale * jax.random.normal(ks[5], (vocab_size, hidden_dim), jnp.float32),
        "b_fc": scale * jax.random.normal(ks[6], (vocab_size,), jnp.float32),
    }


if __name__ == "__main__":
    vocab_size, embed_dim, hidden_dim = 16, 32, 32
    B, T = 2, 8

    key = jax.random.PRNGKey(0)
    k_params, k_tok = jax.random.split(key)
    params = make_params(k_params, vocab_size, embed_dim, hidden_dim)
    token_ids = jax.random.randint(k_tok, (B, T), 0, vocab_size, dtype=jnp.int32)

    logits = rnn_forward_pallas(token_ids, params)
    logits = jax.block_until_ready(logits)

    ref = rnn_forward_ref(token_ids, params)
    assert logits.shape == (B, T, vocab_size)
    assert jnp.allclose(logits, ref, atol=1e-5, rtol=1e-5), "mismatch vs reference"

    print("KERNEL_OK")
</pallas_src>

<mosaic_0001>
module attributes {stable_mosaic.version = 11 : i64} {
  func.func @_rnn_recurrence_kernel(%arg0: i32, %arg1: i32, %arg2: memref<8x8x32xf32, #tpu.memory_space<vmem>>, %arg3: memref<32x128xf32, #tpu.memory_space<vmem>>, %arg4: memref<128x128xf32, #tpu.memory_space<vmem>>, %arg5: memref<1x128xf32, #tpu.memory_space<vmem>>, %arg6: memref<8x8x128xf32, #tpu.memory_space<vmem>>, %arg7: memref<8x128xf32, #tpu.memory_space<vmem>>) attributes {dimension_semantics = [#tpu.dimension_semantics<parallel>, #tpu.dimension_semantics<arbitrary>], iteration_bounds = array<i64: 1, 1>, scalar_prefetch = 0 : i64, scratch_operands = 1 : i64, tpu.core_type = #tpu.core_type<tc>, window_params = [{transform_indices = @transform_0, window_bounds = array<i64: 8, 8, 32>}, {pipeline_mode = #tpu.pipeline_mode<synchronous>, transform_indices = @transform_1, window_bounds = array<i64: 32, 128>}, {pipeline_mode = #tpu.pipeline_mode<synchronous>, transform_indices = @transform_2, window_bounds = array<i64: 128, 128>}, {pipeline_mode = #tpu.pipeline_mode<synchronous>, transform_indices = @transform_3, window_bounds = array<i64: 1, 128>}, {transform_indices = @transform_4, window_bounds = array<i64: 8, 8, 128>}]} {
    %c0_i32 = arith.constant 0 : i32
    %0 = arith.cmpi eq, %arg1, %c0_i32 : i32
    %1 = arith.extui %0 : i1 to i32
    %c0_i32_0 = arith.constant 0 : i32
    %2 = arith.cmpi ne, %1, %c0_i32_0 : i32
    scf.if %2 {
      %cst_45 = arith.constant 0.000000e+00 : f32
      %97 = vector.broadcast %cst_45 : f32 to vector<8x128xf32>
      %c0_46 = arith.constant 0 : index
      %c0_47 = arith.constant 0 : index
      %98 = vector.load %arg7[%c0_46, %c0_47] : memref<8x128xf32, #tpu.memory_space<vmem>>, vector<8x128xf32>
      tpu.vector_store %arg7[%c0_46, %c0_47], %97 {strides = array<i32>} : memref<8x128xf32, #tpu.memory_space<vmem>>, vector<8x128xf32>,
    } else {
    }
    %c0 = arith.constant 0 : index
    %c0_1 = arith.constant 0 : index
    %3 = vector.load %arg3[%c0, %c0_1] : memref<32x128xf32, #tpu.memory_space<vmem>>, vector<32x128xf32>
    %c0_2 = arith.constant 0 : index
    %c0_3 = arith.constant 0 : index
    %4 = vector.load %arg4[%c0_2, %c0_3] : memref<128x128xf32, #tpu.memory_space<vmem>>, vector<128x128xf32>
    %c0_4 = arith.constant 0 : index
    %c0_5 = arith.constant 0 : index
    %5 = vector.load %arg5[%c0_4, %c0_5] : memref<1x128xf32, #tpu.memory_space<vmem>>, vector<1x128xf32>
    %c0_6 = arith.constant 0 : index
    %c0_7 = arith.constant 0 : index
    %c0_8 = arith.constant 0 : index
    %6 = vector.load %arg2[%c0_6, %c0_7, %c0_8] : memref<8x8x32xf32, #tpu.memory_space<vmem>>, vector<8x8x32xf32>
    %c0_9 = arith.constant 0 : index
    %c0_10 = arith.constant 0 : index
    %7 = vector.load %arg7[%c0_9, %c0_10] : memref<8x128xf32, #tpu.memory_space<vmem>>, vector<8x128xf32>
    %8 = vector.extract_strided_slice %6 {offsets = [0, 0, 0], sizes = [8, 1, 32], strides = [1, 1, 1]} : vector<8x8x32xf32> to vector<8x1x32xf32>
    %9 = vector.shape_cast %8 : vector<8x1x32xf32> to vector<8x32xf32>
    %cst = arith.constant dense<0.000000e+00> : vector<8x128xf32>
    %10 = tpu.matmul %9, %3, %cst {dimension_numbers = #tpu.dot_dimension_numbers<[1], [0], [0], [1], [0, 0, 1, 1], [], []>} : vector<8x32xf32>, vector<32x128xf32>, vector<8x128xf32> -> vector<8x128xf32>
    %11 = vector.broadcast %5 : vector<1x128xf32> to vector<8x128xf32>
    %12 = arith.addf %10, %11 : vector<8x128xf32>
    %cst_11 = arith.constant dense<0.000000e+00> : vector<8x128xf32>
    %13 = tpu.matmul %7, %4, %cst_11 {dimension_numbers = #tpu.dot_dimension_numbers<[1], [0], [0], [1], [0, 0, 1, 1], [], []>} : vector<8x128xf32>, vector<128x128xf32>, vector<8x128xf32> -> vector<8x128xf32>
    %14 = arith.addf %12, %13 : vector<8x128xf32>
    %15 = math.tanh %14 : vector<8x128xf32>
    %c0_12 = arith.constant 0 : index
    %c0_13 = arith.constant 0 : index
    %c0_14 = arith.constant 0 : index
    %16 = vector.load %arg6[%c0_12, %c0_13, %c0_14] : memref<8x8x128xf32, #tpu.memory_space<vmem>>, vector<8x1x128xf32>
    %17 = vector.shape_cast %16 : vector<8x1x128xf32> to vector<8x128xf32>
    %18 = vector.shape_cast %15 : vector<8x128xf32> to vector<8x1x128xf32>
    tpu.vector_store %arg6[%c0_12, %c0_13, %c0_14], %18 {strides = array<i32>} : memref<8x8x128xf32, #tpu.memory_space<vmem>>, vector<8x1x128xf32>,
    %19 = vector.extract_strided_slice %6 {offsets = [0, 1, 0], sizes = [8, 1, 32], strides = [1, 1, 1]} : vector<8x8x32xf32> to vector<8x1x32xf32>
    %20 = vector.shape_cast %19 : vector<8x1x32xf32> to vector<8x32xf32>
    %cst_15 = arith.constant dense<0.000000e+00> : vector<8x128xf32>
    %21 = tpu.matmul %20, %3, %cst_15 {dimension_numbers = #tpu.dot_dimension_numbers<[1], [0], [0], [1], [0, 0, 1, 1], [], []>} : vector<8x32xf32>, vector<32x128xf32>, vector<8x128xf32> -> vector<8x128xf32>
    %22 = vector.broadcast %5 : vector<1x128xf32> to vector<8x128xf32>
    %23 = arith.addf %21, %22 : vector<8x128xf32>
    %cst_16 = arith.constant dense<0.000000e+00> : vector<8x128xf32>
    %24 = tpu.matmul %15, %4, %cst_16 {dimension_numbers = #tpu.dot_dimension_numbers<[1], [0], [0], [1], [0, 0, 1, 1], [], []>} : vector<8x128xf32>, vector<128x128xf32>, vector<8x128xf32> -> vector<8x128xf32>
    %25 = arith.addf %23, %24 : vector<8x128xf32>
    %26 = math.tanh %25 : vector<8x128xf32>
    %c0_17 = arith.constant 0 : index
    %c1 = arith.constant 1 : index
    %c0_18 = arith.constant 0 : index
    %27 = vector.load %arg6[%c0_17, %c1, %c0_18] : memref<8x8x128xf32, #tpu.memory_space<vmem>>, vector<8x1x128xf32>
    %28 = vector.shape_cast %27 : vector<8x1x128xf32> to vector<8x128xf32>
    %29 = vector.shape_cast %26 : vector<8x128xf32> to vector<8x1x128xf32>
    tpu.vector_store %arg6[%c0_17, %c1, %c0_18], %29 {strides = array<i32>} : memref<8x8x128xf32, #tpu.memory_space<vmem>>, vector<8x1x128xf32>,
    %30 = vector.extract_strided_slice %6 {offsets = [0, 2, 0], sizes = [8, 1, 32], strides = [1, 1, 1]} : vector<8x8x32xf32> to vector<8x1x32xf32>
    %31 = vector.shape_cast %30 : vector<8x1x32xf32> to vector<8x32xf32>
    %cst_19 = arith.constant dense<0.000000e+00> : vector<8x128xf32>
    %32 = tpu.matmul %31, %3, %cst_19 {dimension_numbers = #tpu.dot_dimension_numbers<[1], [0], [0], [1], [0, 0, 1, 1], [], []>} : vector<8x32xf32>, vector<32x128xf32>, vector<8x128xf32> -> vector<8x128xf32>
    %33 = vector.broadcast %5 : vector<1x128xf32> to vector<8x128xf32>
    %34 = arith.addf %32, %33 : vector<8x128xf32>
    %cst_20 = arith.constant dense<0.000000e+00> : vector<8x128xf32>
    %35 = tpu.matmul %26, %4, %cst_20 {dimension_numbers = #tpu.dot_dimension_numbers<[1], [0], [0], [1], [0, 0, 1, 1], [], []>} : vector<8x128xf32>, vector<128x128xf32>, vector<8x128xf32> -> vector<8x128xf32>
    %36 = arith.addf %34, %35 : vector<8x128xf32>
    %37 = math.tanh %36 : vector<8x128xf32>
    %c0_21 = arith.constant 0 : index
    %c2 = arith.constant 2 : index
    %c0_22 = arith.constant 0 : index
    %38 = vector.load %arg6[%c0_21, %c2, %c0_22] : memref<8x8x128xf32, #tpu.memory_space<vmem>>, vector<8x1x128xf32>
    %39 = vector.shape_cast %38 : vector<8x1x128xf32> to vector<8x128xf32>
    %40 = vector.shape_cast %37 : vector<8x128xf32> to vector<8x1x128xf32>
    tpu.vector_store %arg6[%c0_21, %c2, %c0_22], %40 {strides = array<i32>} : memref<8x8x128xf32, #tpu.memory_space<vmem>>, vector<8x1x128xf32>,
    %41 = vector.extract_strided_slice %6 {offsets = [0, 3, 0], sizes = [8, 1, 32], strides = [1, 1, 1]} : vector<8x8x32xf32> to vector<8x1x32xf32>
    %42 = vector.shape_cast %41 : vector<8x1x32xf32> to vector<8x32xf32>
    %cst_23 = arith.constant dense<0.000000e+00> : vector<8x128xf32>
    %43 = tpu.matmul %42, %3, %cst_23 {dimension_numbers = #tpu.dot_dimension_numbers<[1], [0], [0], [1], [0, 0, 1, 1], [], []>} : vector<8x32xf32>, vector<32x128xf32>, vector<8x128xf32> -> vector<8x128xf32>
    %44 = vector.broadcast %5 : vector<1x128xf32> to vector<8x128xf32>
    %45 = arith.addf %43, %44 : vector<8x128xf32>
    %cst_24 = arith.constant dense<0.000000e+00> : vector<8x128xf32>
    %46 = tpu.matmul %37, %4, %cst_24 {dimension_numbers = #tpu.dot_dimension_numbers<[1], [0], [0], [1], [0, 0, 1, 1], [], []>} : vector<8x128xf32>, vector<128x128xf32>, vector<8x128xf32> -> vector<8x128xf32>
    %47 = arith.addf %45, %46 : vector<8x128xf32>
    %48 = math.tanh %47 : vector<8x128xf32>
    %c0_25 = arith.constant 0 : index
    %c3 = arith.constant 3 : index
    %c0_26 = arith.constant 0 : index
    %49 = vector.load %arg6[%c0_25, %c3, %c0_26] : memref<8x8x128xf32, #tpu.memory_space<vmem>>, vector<8x1x128xf32>
    %50 = vector.shape_cast %49 : vector<8x1x128xf32> to vector<8x128xf32>
    %51 = vector.shape_cast %48 : vector<8x128xf32> to vector<8x1x128xf32>
    tpu.vector_store %arg6[%c0_25, %c3, %c0_26], %51 {strides = array<i32>} : memref<8x8x128xf32, #tpu.memory_space<vmem>>, vector<8x1x128xf32>,
    %52 = vector.extract_strided_slice %6 {offsets = [0, 4, 0], sizes = [8, 1, 32], strides = [1, 1, 1]} : vector<8x8x32xf32> to vector<8x1x32xf32>
    %53 = vector.shape_cast %52 : vector<8x1x32xf32> to vector<8x32xf32>
    %cst_27 = arith.constant dense<0.000000e+00> : vector<8x128xf32>
    %54 = tpu.matmul %53, %3, %cst_27 {dimension_numbers = #tpu.dot_dimension_numbers<[1], [0], [0], [1], [0, 0, 1, 1], [], []>} : vector<8x32xf32>, vector<32x128xf32>, vector<8x128xf32> -> vector<8x128xf32>
    %55 = vector.broadcast %5 : vector<1x128xf32> to vector<8x128xf32>
    %56 = arith.addf %54, %55 : vector<8x128xf32>
    %cst_28 = arith.constant dense<0.000000e+00> : vector<8x128xf32>
    %57 = tpu.matmul %48, %4, %cst_28 {dimension_numbers = #tpu.dot_dimension_numbers<[1], [0], [0], [1], [0, 0, 1, 1], [], []>} : vector<8x128xf32>, vector<128x128xf32>, vector<8x128xf32> -> vector<8x128xf32>
    %58 = arith.addf %56, %57 : vector<8x128xf32>
    %59 = math.tanh %58 : vector<8x128xf32>
    %c0_29 = arith.constant 0 : index
    %c4 = arith.constant 4 : index
    %c0_30 = arith.constant 0 : index
    %60 = vector.load %arg6[%c0_29, %c4, %c0_30] : memref<8x8x128xf32, #tpu.memory_space<vmem>>, vector<8x1x128xf32>
    %61 = vector.shape_cast %60 : vector<8x1x128xf32> to vector<8x128xf32>
    %62 = vector.shape_cast %59 : vector<8x128xf32> to vector<8x1x128xf32>
    tpu.vector_store %arg6[%c0_29, %c4, %c0_30], %62 {strides = array<i32>} : memref<8x8x128xf32, #tpu.memory_space<vmem>>, vector<8x1x128xf32>,
    %63 = vector.extract_strided_slice %6 {offsets = [0, 5, 0], sizes = [8, 1, 32], strides = [1, 1, 1]} : vector<8x8x32xf32> to vector<8x1x32xf32>
    %64 = vector.shape_cast %63 : vector<8x1x32xf32> to vector<8x32xf32>
    %cst_31 = arith.constant dense<0.000000e+00> : vector<8x128xf32>
    %65 = tpu.matmul %64, %3, %cst_31 {dimension_numbers = #tpu.dot_dimension_numbers<[1], [0], [0], [1], [0, 0, 1, 1], [], []>} : vector<8x32xf32>, vector<32x128xf32>, vector<8x128xf32> -> vector<8x128xf32>
    %66 = vector.broadcast %5 : vector<1x128xf32> to vector<8x128xf32>
    %67 = arith.addf %65, %66 : vector<8x128xf32>
    %cst_32 = arith.constant dense<0.000000e+00> : vector<8x128xf32>
    %68 = tpu.matmul %59, %4, %cst_32 {dimension_numbers = #tpu.dot_dimension_numbers<[1], [0], [0], [1], [0, 0, 1, 1], [], []>} : vector<8x128xf32>, vector<128x128xf32>, vector<8x128xf32> -> vector<8x128xf32>
    %69 = arith.addf %67, %68 : vector<8x128xf32>
    %70 = math.tanh %69 : vector<8x128xf32>
    %c0_33 = arith.constant 0 : index
    %c5 = arith.constant 5 : index
    %c0_34 = arith.constant 0 : index
    %71 = vector.load %arg6[%c0_33, %c5, %c0_34] : memref<8x8x128xf32, #tpu.memory_space<vmem>>, vector<8x1x128xf32>
    %72 = vector.shape_cast %71 : vector<8x1x128xf32> to vector<8x128xf32>
    %73 = vector.shape_cast %70 : vector<8x128xf32> to vector<8x1x128xf32>
    tpu.vector_store %arg6[%c0_33, %c5, %c0_34], %73 {strides = array<i32>} : memref<8x8x128xf32, #tpu.memory_space<vmem>>, vector<8x1x128xf32>,
    %74 = vector.extract_strided_slice %6 {offsets = [0, 6, 0], sizes = [8, 1, 32], strides = [1, 1, 1]} : vector<8x8x32xf32> to vector<8x1x32xf32>
    %75 = vector.shape_cast %74 : vector<8x1x32xf32> to vector<8x32xf32>
    %cst_35 = arith.constant dense<0.000000e+00> : vector<8x128xf32>
    %76 = tpu.matmul %75, %3, %cst_35 {dimension_numbers = #tpu.dot_dimension_numbers<[1], [0], [0], [1], [0, 0, 1, 1], [], []>} : vector<8x32xf32>, vector<32x128xf32>, vector<8x128xf32> -> vector<8x128xf32>
    %77 = vector.broadcast %5 : vector<1x128xf32> to vector<8x128xf32>
    %78 = arith.addf %76, %77 : vector<8x128xf32>
    %cst_36 = arith.constant dense<0.000000e+00> : vector<8x128xf32>
    %79 = tpu.matmul %70, %4, %cst_36 {dimension_numbers = #tpu.dot_dimension_numbers<[1], [0], [0], [1], [0, 0, 1, 1], [], []>} : vector<8x128xf32>, vector<128x128xf32>, vector<8x128xf32> -> vector<8x128xf32>
    %80 = arith.addf %78, %79 : vector<8x128xf32>
    %81 = math.tanh %80 : vector<8x128xf32>
    %c0_37 = arith.constant 0 : index
    %c6 = arith.constant 6 : index
    %c0_38 = arith.constant 0 : index
    %82 = vector.load %arg6[%c0_37, %c6, %c0_38] : memref<8x8x128xf32, #tpu.memory_space<vmem>>, vector<8x1x128xf32>
    %83 = vector.shape_cast %82 : vector<8x1x128xf32> to vector<8x128xf32>
    %84 = vector.shape_cast %81 : vector<8x128xf32> to vector<8x1x128xf32>
    tpu.vector_store %arg6[%c0_37, %c6, %c0_38], %84 {strides = array<i32>} : memref<8x8x128xf32, #tpu.memory_space<vmem>>, vector<8x1x128xf32>,
    %85 = vector.extract_strided_slice %6 {offsets = [0, 7, 0], sizes = [8, 1, 32], strides = [1, 1, 1]} : vector<8x8x32xf32> to vector<8x1x32xf32>
    %86 = vector.shape_cast %85 : vector<8x1x32xf32> to vector<8x32xf32>
    %cst_39 = arith.constant dense<0.000000e+00> : vector<8x128xf32>
    %87 = tpu.matmul %86, %3, %cst_39 {dimension_numbers = #tpu.dot_dimension_numbers<[1], [0], [0], [1], [0, 0, 1, 1], [], []>} : vector<8x32xf32>, vector<32x128xf32>, vector<8x128xf32> -> vector<8x128xf32>
    %88 = vector.broadcast %5 : vector<1x128xf32> to vector<8x128xf32>
    %89 = arith.addf %87, %88 : vector<8x128xf32>
    %cst_40 = arith.constant dense<0.000000e+00> : vector<8x128xf32>
    %90 = tpu.matmul %81, %4, %cst_40 {dimension_numbers = #tpu.dot_dimension_numbers<[1], [0], [0], [1], [0, 0, 1, 1], [], []>} : vector<8x128xf32>, vector<128x128xf32>, vector<8x128xf32> -> vector<8x128xf32>
    %91 = arith.addf %89, %90 : vector<8x128xf32>
    %92 = math.tanh %91 : vector<8x128xf32>
    %c0_41 = arith.constant 0 : index
    %c7 = arith.constant 7 : index
    %c0_42 = arith.constant 0 : index
    %93 = vector.load %arg6[%c0_41, %c7, %c0_42] : memref<8x8x128xf32, #tpu.memory_space<vmem>>, vector<8x1x128xf32>
    %94 = vector.shape_cast %93 : vector<8x1x128xf32> to vector<8x128xf32>
    %95 = vector.shape_cast %92 : vector<8x128xf32> to vector<8x1x128xf32>
    tpu.vector_store %arg6[%c0_41, %c7, %c0_42], %95 {strides = array<i32>} : memref<8x8x128xf32, #tpu.memory_space<vmem>>, vector<8x1x128xf32>,
    %c0_43 = arith.constant 0 : index
    %c0_44 = arith.constant 0 : index
    %96 = vector.load %arg7[%c0_43, %c0_44] : memref<8x128xf32, #tpu.memory_space<vmem>>, vector<8x128xf32>
    tpu.vector_store %arg7[%c0_43, %c0_44], %92 {strides = array<i32>} : memref<8x128xf32, #tpu.memory_space<vmem>>, vector<8x128xf32>,
    return
  }
  func.func @transform_0(%arg0: i32, %arg1: i32) -> (i32, i32, i32) {
    %c0_i32 = arith.constant 0 : i32
    %c0_i32_0 = arith.constant 0 : i32
    return %arg0, %arg1, %c0_i32 : i32, i32, i32
  }
  func.func @transform_1(%arg0: i32, %arg1: i32) -> (i32, i32) {
    %c0_i32 = arith.constant 0 : i32
    %c0_i32_0 = arith.constant 0 : i32
    %c0_i32_1 = arith.constant 0 : i32
    return %c0_i32, %c0_i32_0 : i32, i32
  }
  func.func @transform_2(%arg0: i32, %arg1: i32) -> (i32, i32) {
    %c0_i32 = arith.constant 0 : i32
    %c0_i32_0 = arith.constant 0 : i32
    %c0_i32_1 = arith.constant 0 : i32
    return %c0_i32, %c0_i32_0 : i32, i32
  }
  func.func @transform_3(%arg0: i32, %arg1: i32) -> (i32, i32) {
    %c0_i32 = arith.constant 0 : i32
    %c0_i32_0 = arith.constant 0 : i32
    %c0_i32_1 = arith.constant 0 : i32
    return %c0_i32, %c0_i32_0 : i32, i32
  }
  func.func @transform_4(%arg0: i32, %arg1: i32) -> (i32, i32, i32) {
    %c0_i32 = arith.constant 0 : i32
    %c0_i32_0 = arith.constant 0 : i32
    return %arg0, %arg1, %c0_i32 : i32, i32, i32
  }
}

</mosaic_0001>

<llo_original>
// kernel: tpu_custom_call.1
$region0: #{tpu_custom_call.1}
  #allocation0 [shape = 'u32[]', space=smem, size = 0x4, offset = 0x4, fixed_abs, tag = 'smem constant byte address 0x4 - core index']
  #allocation1 [shape = 'u32[72,128]{1,0:T(1,128)}', space=vmem, size = 0x9000, scoped, tag = 'internal scratch']
  #allocation2 [shape = 'f32[8,128]{1,0:T(8,128)}', space=vmem, size = 0x1000, scoped, tag = 'scratch operand']
  %s0 = inlined_call_operand.hbm [shape: f32[8,8,32], index: 0, kind: input, shape index: {}]
  %s1 = inlined_call_operand.hbm [shape: f32[32,128], index: 1, kind: input, shape index: {}]
  %s2 = inlined_call_operand.hbm [shape: f32[128,128], index: 2, kind: input, shape index: {}]
  %s3 = inlined_call_operand.vmem [shape: f32[1,128], index: 3, kind: input, shape index: {}]
  %s4 = inlined_call_operand.hbm [shape: f32[8,8,128], index: 4, kind: output, shape index: {}]
  %s5 = sld [smem:[#allocation0]]
  $region42: #{tpu_custom_call.1} parent=0
    _
  %s7 = ssub.s32 1, %s5
  %s8 = scalar_select 0, %s7, %s5
  $region1: #{tpu_custom_call.1} parent=0
    #allocation3 [shape = 'u8[32768]{0}', space=vmem, size = 0x8000, scoped, tag = 'input window, operand 0, single buffered']
    #allocation4 [shape = 's32[1]{0}', space=sflag, size = 0x4, scoped, tag = 'scoped memory for tpu_custom_call.1']
    #allocation5 [shape = 's32[1]{0}', space=sflag, size = 0x4, scoped, tag = 'scoped memory for tpu_custom_call.1']
    #allocation6 [shape = 'u8[16384]{0}', space=vmem, size = 0x4000, scoped, tag = 'input window, operand 1, single buffered']
    #allocation7 [shape = 's32[1]{0}', space=sflag, size = 0x4, scoped, tag = 'scoped memory for tpu_custom_call.1']
    #allocation8 [shape = 'u8[65536]{0}', space=vmem, size = 0x10000, scoped, tag = 'input window, operand 2, single buffered']
    #allocation9 [shape = 'u8[32768]{0}', space=vmem, size = 0x8000, scoped, tag = 'output window, operand 0, single buffered']
    %9 = vsyncpa [#allocation4], 0
    %10 = vsyncpa [#allocation7], 0
    %11 = vsyncpa [#allocation5], 0
    // Predicated region
    $region2: #{tpu_custom_call.1} parent=1 // pred_check
      _
    $region3: #{tpu_custom_call.1} parent=1 // pred_check_branch
      %13 = sbr.rel (0) target = $region5
    $region4: #{tpu_custom_call.1} parent=1 // pred_region
      %15 = vsyncadd [#allocation4], 0
      %s16 = sshll.u32 %s0, 4
      %s17 = int_to_ptr.hbm [resolvable:$true] %s16
      %s18 = sshll.u32 [#allocation3], 4
      %s19 = int_to_ptr.vmem [resolvable:$true] %s18
      %24 = dma.hbm_to_vmem [thread:$0]  %s17, 1024, %s19, [#allocation4], 128, 128, 8
    $region5: #{tpu_custom_call.1} parent=1 // pred_fallthru
      _
    // Predicated region
    $region6: #{tpu_custom_call.1} parent=1 // pred_check
      _
    $region7: #{tpu_custom_call.1} parent=1 // pred_check_branch
      %26 = sbr.rel (0) target = $region9
    $region8: #{tpu_custom_call.1} parent=1 // pred_region
      %28 = vsyncadd [#allocation7], 0
      %s29 = sshll.u32 %s1, 4
      %s30 = int_to_ptr.hbm [resolvable:$true] %s29
      %s31 = sshll.u32 [#allocation6], 4
      %s32 = int_to_ptr.vmem [resolvable:$true] %s31
      %37 = dma.hbm_to_vmem [thread:$0]  %s30, 512, %s32, [#allocation7], 128, 128, 8
    $region9: #{tpu_custom_call.1} parent=1 // pred_fallthru
      _
    // Predicated region
    $region10: #{tpu_custom_call.1} parent=1 // pred_check
      _
    $region11: #{tpu_custom_call.1} parent=1 // pred_check_branch
      %39 = sbr.rel (0) target = $region13
    $region12: #{tpu_custom_call.1} parent=1 // pred_region
      %41 = vsyncadd [#allocation7], 0
      %s42 = sshll.u32 %s2, 4
      %s43 = int_to_ptr.hbm [resolvable:$true] %s42
      %s44 = sshll.u32 [#allocation8], 4
      %s45 = int_to_ptr.vmem [resolvable:$true] %s44
      %50 = dma.hbm_to_vmem [thread:$0]  %s43, 2048, %s45, [#allocation7], 128, 128, 8
    $region13: #{tpu_custom_call.1} parent=1 // pred_fallthru
      _
    // Predicated region
    $region14: #{tpu_custom_call.1} parent=1 // pred_check
      _
    $region15: #{tpu_custom_call.1} parent=1 // pred_check_branch
      %52 = sbr.rel (0) target = $region17
    $region16: #{tpu_custom_call.1} parent=1 // pred_region
      _
    $region17: #{tpu_custom_call.1} parent=1 // pred_fallthru
      _
    // Predicated region
    $region18: #{tpu_custom_call.1} parent=1 // pred_check
      _
    $region19: #{tpu_custom_call.1} parent=1 // pred_check_branch
      %54 = sbr.rel (0) target = $region21
    $region20: #{tpu_custom_call.1} parent=1 // pred_region
      %56 = dma.done [#allocation4], 1024
    $region21: #{tpu_custom_call.1} parent=1 // pred_fallthru
      _
    // Predicated region
    $region22: #{tpu_custom_call.1} parent=1 // pred_check
      _
    $region23: #{tpu_custom_call.1} parent=1 // pred_check_branch
      %58 = sbr.rel (0) target = $region25
    $region24: #{tpu_custom_call.1} parent=1 // pred_region
      %60 = dma.done [#allocation7], 512
    $region25: #{tpu_custom_call.1} parent=1 // pred_fallthru
      _
    // Predicated region
    $region26: #{tpu_custom_call.1} parent=1 // pred_check
      _
    $region27: #{tpu_custom_call.1} parent=1 // pred_check_branch
      %62 = sbr.rel (0) target = $region29
    $region28: #{tpu_custom_call.1} parent=1 // pred_region
      %64 = dma.done [#allocation7], 2048
    $region29: #{tpu_custom_call.1} parent=1 // pred_fallthru
      _
    %p65 = scmp.eq.s32.totalorder 0, 0
    // Predicated region
    $region30: #{tpu_custom_call.1} parent=1 // pred_check
      %p66 = pneg %p65
    $region31: #{tpu_custom_call.1} parent=1 // pred_check_branch
      %68 = sbr.rel (%p66) target = $region33
    $region32: #{tpu_custom_call.1} parent=1 // pred_region
      %69 = vst [vmem:[#allocation2] sm:$0xff] 0.0
    $region33: #{tpu_custom_call.1} parent=1 // pred_fallthru
      _
    %v70 = vld [vmem:[#allocation6] sm:$0xff]
    %v71 = vld [vmem:[#allocation6 + $0x8] sm:$0xff]
    %v72 = vld [vmem:[#allocation6 + $0x10] sm:$0xff]
    %v73 = vld [vmem:[#allocation6 + $0x18] sm:$0xff]
    %v74 = vld [vmem:[#allocation8] sm:$0xff]
    %v75 = vld [vmem:[#allocation8 + $0x8] sm:$0xff]
    %v76 = vld [vmem:[#allocation8 + $0x10] sm:$0xff]
    %v77 = vld [vmem:[#allocation8 + $0x18] sm:$0xff]
    %v78 = vld [vmem:[#allocation8 + $0x20] sm:$0xff]
    %v79 = vld [vmem:[#allocation8 + $0x28] sm:$0xff]
    %v80 = vld [vmem:[#allocation8 + $0x30] sm:$0xff]
    %v81 = vld [vmem:[#allocation8 + $0x38] sm:$0xff]
    %v82 = vld [vmem:[#allocation8 + $0x40] sm:$0xff]
    %v83 = vld [vmem:[#allocation8 + $0x48] sm:$0xff]
    %v84 = vld [vmem:[#allocation8 + $0x50] sm:$0xff]
    %v85 = vld [vmem:[#allocation8 + $0x58] sm:$0xff]
    %v86 = vld [vmem:[#allocation8 + $0x60] sm:$0xff]
    %v87 = vld [vmem:[#allocation8 + $0x68] sm:$0xff]
    %v88 = vld [vmem:[#allocation8 + $0x70] sm:$0xff]
    %v89 = vld [vmem:[#allocation8 + $0x78] sm:$0xff]
    %v90 = vld [vmem:[%s3] sm:$0x1]
    %v91 = vld [vmem:[#allocation3] sm:$0xff]
    %v92 = vld [vmem:[#allocation3 + $0x8] sm:$0xff]
    %v93 = vld [vmem:[#allocation3 + $0x10] sm:$0xff]
    %v94 = vld [vmem:[#allocation3 + $0x18] sm:$0xff]
    %v95 = vld [vmem:[#allocation3 + $0x20] sm:$0xff]
    %v96 = vld [vmem:[#allocation3 + $0x28] sm:$0xff]
    %v97 = vld [vmem:[#allocation3 + $0x30] sm:$0xff]
    %v98 = vld [vmem:[#allocation3 + $0x38] sm:$0xff]
    %v99 = vld [vmem:[#allocation2] sm:$0xff]
    %v101 = vperm.slane %v90, 0
    %v111 = vrot.slane %v92, 7
    %vm112 = vcmask 1041409
    %v113 = vsel %vm112, %v111, %v91
    %v114 = vrot.slane %v93, 6
    %vm115 = vcmask 1042434
    %v116 = vsel %vm115, %v114, %v113
    %v117 = vrot.slane %v94, 5
    %vm118 = vcmask 1043459
    %v119 = vsel %vm118, %v117, %v116
    %v120 = vrot.slane %v95, 4
    %vm121 = vcmask 1044484
    %v122 = vsel %vm121, %v120, %v119
    %v123 = vrot.slane %v96, 3
    %vm124 = vcmask 1045509
    %v125 = vsel %vm124, %v123, %v122
    %v126 = vrot.slane %v97, 2
    %vm127 = vcmask 1046534
    %v128 = vsel %vm127, %v126, %v125
    %v129 = vrot.slane %v98, 1
    %vm130 = vcmask 1047559
    %v131 = vsel %vm130, %v129, %v128
    %vm132 = vcmask 261120
    %v133 = vsel %vm132, %v131, 0
    %135 = vmatpush.msra.mxu0 0.0
    %136 = vmatpush.msra.mxu0 0.0
    %137 = vmatpush.msra.mxu0 0.0
    %138 = vmatpush.msra.mxu0 0.0
    %139 = vmatpush.msra.mxu0 0.0
    %140 = vmatpush.msra.mxu0 0.0
    %141 = vmatpush.msra.mxu0 0.0
    %142 = vmatpush.msra.mxu0 0.0
    %143 = vmatpush.msra.mxu0 0.0
    %144 = vmatpush.msra.mxu0 0.0
    %145 = vmatpush.msra.mxu0 0.0
    %146 = vmatpush.msra.mxu0 0.0
    %147 = vmatpush.msra.mxu0 %v73
    %148 = vmatpush.msra.mxu0 %v72
    %149 = vmatpush.msra.mxu0 %v71
    %150 = vmatpush.msra.mxu0 %v70
    %151 = vmatmul.f32.gmra.mxu0 %v133
    %v152 = vpop.f32.mrf.mxu0
    %v153 = vadd.f32 %v101, %v152
    %154 = vdwg.mxu0
    %155 = vmatpush.msra.mxu0 %v89
    %156 = vmatpush.msra.mxu0 %v88
    %157 = vmatpush.msra.mxu0 %v87
    %158 = vmatpush.msra.mxu0 %v86
    %159 = vmatpush.msra.mxu0 %v85
    %160 = vmatpush.msra.mxu0 %v84
    %161 = vmatpush.msra.mxu0 %v83
    %162 = vmatpush.msra.mxu0 %v82
    %163 = vmatpush.msra.mxu0 %v81
    %164 = vmatpush.msra.mxu0 %v80
    %165 = vmatpush.msra.mxu0 %v79
    %166 = vmatpush.msra.mxu0 %v78
    %167 = vmatpush.msra.mxu0 %v77
    %168 = vmatpush.msra.mxu0 %v76
    %169 = vmatpush.msra.mxu0 %v75
    %170 = vmatpush.msra.mxu0 %v74
    %171 = vmatmul.f32.gmra.mxu0 %v99
    %v172 = vpop.f32.mrf.mxu0
    %v173 = vadd.f32 0.0, %v172
    %174 = vdwg.mxu0
    %v175 = vadd.f32 %v153, %v173
    %v176 = vtanh.pop %v175
    %v178 = vrot.slane %v176, 1
    %v179 = vrot.slane %v176, 2
    %v180 = vrot.slane %v176, 3
    %v181 = vrot.slane %v176, 4
    %v182 = vrot.slane %v176, 5
    %v183 = vrot.slane %v176, 6
    %v184 = vrot.slane %v176, 7
    %192 = vst [vmem:[#allocation9] sm:$0x1] %v176
    %193 = vst [vmem:[#allocation9 + $0x8] sm:$0x1] %v178
    %194 = vst [vmem:[#allocation9 + $0x10] sm:$0x1] %v179
    %195 = vst [vmem:[#allocation9 + $0x18] sm:$0x1] %v180
    %196 = vst [vmem:[#allocation9 + $0x20] sm:$0x1] %v181
    %197 = vst [vmem:[#allocation9 + $0x28] sm:$0x1] %v182
    %198 = vst [vmem:[#allocation9 + $0x30] sm:$0x1] %v183
    %199 = vst [vmem:[#allocation9 + $0x38] sm:$0x1] %v184
    %v200 = vrot.slane %v91, 1
    %v201 = vsel %vm112, %v92, %v200
    %v202 = vrot.slane %v93, 7
    %v203 = vsel %vm115, %v202, %v201
    %v204 = vrot.slane %v94, 6
    %v205 = vsel %vm118, %v204, %v203
    %v206 = vrot.slane %v95, 5
    %v207 = vsel %vm121, %v206, %v205
    %v208 = vrot.slane %v96, 4
    %v209 = vsel %vm124, %v208, %v207
    %v210 = vrot.slane %v97, 3
    %v211 = vsel %vm127, %v210, %v209
    %v212 = vrot.slane %v98, 2
    %v213 = vsel %vm130, %v212, %v211
    %v214 = vsel %vm132, %v213, 0
    %216 = vmatpush.msra.mxu0 0.0
    %217 = vmatpush.msra.mxu0 0.0
    %218 = vmatpush.msra.mxu0 0.0
    %219 = vmatpush.msra.mxu0 0.0
    %220 = vmatpush.msra.mxu0 0.0
    %221 = vmatpush.msra.mxu0 0.0
    %222 = vmatpush.msra.mxu0 0.0
    %223 = vmatpush.msra.mxu0 0.0
    %224 = vmatpush.msra.mxu0 0.0
    %225 = vmatpush.msra.mxu0 0.0
    %226 = vmatpush.msra.mxu0 0.0
    %227 = vmatpush.msra.mxu0 0.0
    %228 = vmatpush.msra.mxu0 %v73
    %229 = vmatpush.msra.mxu0 %v72
    %230 = vmatpush.msra.mxu0 %v71
    %231 = vmatpush.msra.mxu0 %v70
    %232 = vmatmul.f32.gmra.mxu0 %v214
    %v233 = vpop.f32.mrf.mxu0
    %v234 = vadd.f32 %v101, %v233
    %235 = vdwg.mxu0
    %236 = vmatpush.msra.mxu0 %v89
    %237 = vmatpush.msra.mxu0 %v88
    %238 = vmatpush.msra.mxu0 %v87
    %239 = vmatpush.msra.mxu0 %v86
    %240 = vmatpush.msra.mxu0 %v85
    %241 = vmatpush.msra.mxu0 %v84
    %242 = vmatpush.msra.mxu0 %v83
    %243 = vmatpush.msra.mxu0 %v82
    %244 = vmatpush.msra.mxu0 %v81
    %245 = vmatpush.msra.mxu0 %v80
    %246 = vmatpush.msra.mxu0 %v79
    %247 = vmatpush.msra.mxu0 %v78
    %248 = vmatpush.msra.mxu0 %v77
    %249 = vmatpush.msra.mxu0 %v76
    %250 = vmatpush.msra.mxu0 %v75
    %251 = vmatpush.msra.mxu0 %v74
    %252 = vmatmul.f32.gmra.mxu0 %v176
    %v253 = vpop.f32.mrf.mxu0
    %v254 = vadd.f32 0.0, %v253
    %255 = vdwg.mxu0
    %v256 = vadd.f32 %v234, %v254
    %v257 = vtanh.pop %v256
    %v259 = vrot.slane %v257, 1
    %v260 = vrot.slane %v257, 2
    %v261 = vrot.slane %v257, 3
    %v262 = vrot.slane %v257, 4
    %v263 = vrot.slane %v257, 5
    %v264 = vrot.slane %v257, 6
    %v265 = vrot.slane %v257, 7
    %273 = vst [vmem:[#allocation9 + $0x1] sm:$0x1] %v257
    %274 = vst [vmem:[#allocation9 + $0x9] sm:$0x1] %v259
    %275 = vst [vmem:[#allocation9 + $0x11] sm:$0x1] %v260
    %276 = vst [vmem:[#allocation9 + $0x19] sm:$0x1] %v261
    %277 = vst [vmem:[#allocation9 + $0x21] sm:$0x1] %v262
    %278 = vst [vmem:[#allocation9 + $0x29] sm:$0x1] %v263
    %279 = vst [vmem:[#allocation9 + $0x31] sm:$0x1] %v264
    %280 = vst [vmem:[#allocation9 + $0x39] sm:$0x1] %v265
    %v281 = vrot.slane %v91, 2
    %v282 = vrot.slane %v92, 1
    %v283 = vsel %vm112, %v282, %v281
    %v284 = vsel %vm115, %v93, %v283
    %v285 = vrot.slane %v94, 7
    %v286 = vsel %vm118, %v285, %v284
    %v287 = vrot.slane %v95, 6
    %v288 = vsel %vm121, %v287, %v286
    %v289 = vrot.slane %v96, 5
    %v290 = vsel %vm124, %v289, %v288
    %v291 = vrot.slane %v97, 4
    %v292 = vsel %vm127, %v291, %v290
    %v293 = vrot.slane %v98, 3
    %v294 = vsel %vm130, %v293, %v292
    %v295 = vsel %vm132, %v294, 0
    %297 = vmatpush.msra.mxu0 0.0
    %298 = vmatpush.msra.mxu0 0.0
    %299 = vmatpush.msra.mxu0 0.0
    %300 = vmatpush.msra.mxu0 0.0
    %301 = vmatpush.msra.mxu0 0.0
    %302 = vmatpush.msra.mxu0 0.0
    %303 = vmatpush.msra.mxu0 0.0
    %304 = vmatpush.msra.mxu0 0.0
    %305 = vmatpush.msra.mxu0 0.0
    %306 = vmatpush.msra.mxu0 0.0
    %307 = vmatpush.msra.mxu0 0.0
    %308 = vmatpush.msra.mxu0 0.0
    %309 = vmatpush.msra.mxu0 %v73
    %310 = vmatpush.msra.mxu0 %v72
    %311 = vmatpush.msra.mxu0 %v71
    %312 = vmatpush.msra.mxu0 %v70
    %313 = vmatmul.f32.gmra.mxu0 %v295
    %v314 = vpop.f32.mrf.mxu0
    %v315 = vadd.f32 %v101, %v314
    %316 = vdwg.mxu0
    %317 = vmatpush.msra.mxu0 %v89
    %318 = vmatpush.msra.mxu0 %v88
    %319 = vmatpush.msra.mxu0 %v87
    %320 = vmatpush.msra.mxu0 %v86
    %321 = vmatpush.msra.mxu0 %v85
    %322 = vmatpush.msra.mxu0 %v84
    %323 = vmatpush.msra.mxu0 %v83
    %324 = vmatpush.msra.mxu0 %v82
    %325 = vmatpush.msra.mxu0 %v81
    %326 = vmatpush.msra.mxu0 %v80
    %327 = vmatpush.msra.mxu0 %v79
    %328 = vmatpush.msra.mxu0 %v78
    %329 = vmatpush.msra.mxu0 %v77
    %330 = vmatpush.msra.mxu0 %v76
    %331 = vmatpush.msra.mxu0 %v75
    %332 = vmatpush.msra.mxu0 %v74
    %333 = vmatmul.f32.gmra.mxu0 %v257
    %v334 = vpop.f32.mrf.mxu0
    %v335 = vadd.f32 0.0, %v334
    %336 = vdwg.mxu0
    %v337 = vadd.f32 %v315, %v335
    %v338 = vtanh.pop %v337
    %v340 = vrot.slane %v338, 1
    %v341 = vrot.slane %v338, 2
    %v342 = vrot.slane %v338, 3
    %v343 = vrot.slane %v338, 4
    %v344 = vrot.slane %v338, 5
    %v345 = vrot.slane %v338, 6
    %v346 = vrot.slane %v338, 7
    %354 = vst [vmem:[#allocation9 + $0x2] sm:$0x1] %v338
    %355 = vst [vmem:[#allocation9 + $0xa] sm:$0x1] %v340
    %356 = vst [vmem:[#allocation9 + $0x12] sm:$0x1] %v341
    %357 = vst [vmem:[#allocation9 + $0x1a] sm:$0x1] %v342
    %358 = vst [vmem:[#allocation9 + $0x22] sm:$0x1] %v343
    %359 = vst [vmem:[#allocation9 + $0x2a] sm:$0x1] %v344
    %360 = vst [vmem:[#allocation9 + $0x32] sm:$0x1] %v345
    %361 = vst [vmem:[#allocation9 + $0x3a] sm:$0x1] %v346
    %v362 = vrot.slane %v91, 3
    %v363 = vrot.slane %v92, 2
    %v364 = vsel %vm112, %v363, %v362
    %v365 = vrot.slane %v93, 1
    %v366 = vsel %vm115, %v365, %v364
    %v367 = vsel %vm118, %v94, %v366
    %v368 = vrot.slane %v95, 7
    %v369 = vsel %vm121, %v368, %v367
    %v370 = vrot.slane %v96, 6
    %v371 = vsel %vm124, %v370, %v369
    %v372 = vrot.slane %v97, 5
    %v373 = vsel %vm127, %v372, %v371
    %v374 = vrot.slane %v98, 4
    %v375 = vsel %vm130, %v374, %v373
    %v376 = vsel %vm132, %v375, 0
    %378 = vmatpush.msra.mxu0 0.0
    %379 = vmatpush.msra.mxu0 0.0
    %380 = vmatpush.msra.mxu0 0.0
    %381 = vmatpush.msra.mxu0 0.0
    %382 = vmatpush.msra.mxu0 0.0
    %383 = vmatpush.msra.mxu0 0.0
    %384 = vmatpush.msra.mxu0 0.0
    %385 = vmatpush.msra.mxu0 0.0
    %386 = vmatpush.msra.mxu0 0.0
    %387 = vmatpush.msra.mxu0 0.0
    %388 = vmatpush.msra.mxu0 0.0
    %389 = vmatpush.msra.mxu0 0.0
    %390 = vmatpush.msra.mxu0 %v73
    %391 = vmatpush.msra.mxu0 %v72
    %392 = vmatpush.msra.mxu0 %v71
    %393 = vmatpush.msra.mxu0 %v70
    %394 = vmatmul.f32.gmra.mxu0 %v376
    %v395 = vpop.f32.mrf.mxu0
    %v396 = vadd.f32 %v101, %v395
    %397 = vdwg.mxu0
    %398 = vmatpush.msra.mxu0 %v89
    %399 = vmatpush.msra.mxu0 %v88
    %400 = vmatpush.msra.mxu0 %v87
    %401 = vmatpush.msra.mxu0 %v86
    %402 = vmatpush.msra.mxu0 %v85
    %403 = vmatpush.msra.mxu0 %v84
    %404 = vmatpush.msra.mxu0 %v83
    %405 = vmatpush.msra.mxu0 %v82
    %406 = vmatpush.msra.mxu0 %v81
    %407 = vmatpush.msra.mxu0 %v80
    %408 = vmatpush.msra.mxu0 %v79
    %409 = vmatpush.msra.mxu0 %v78
    %410 = vmatpush.msra.mxu0 %v77
    %411 = vmatpush.msra.mxu0 %v76
    %412 = vmatpush.msra.mxu0 %v75
    %413 = vmatpush.msra.mxu0 %v74
    %414 = vmatmul.f32.gmra.mxu0 %v338
    %v415 = vpop.f32.mrf.mxu0
    %v416 = vadd.f32 0.0, %v415
    %417 = vdwg.mxu0
    %v418 = vadd.f32 %v396, %v416
    %v419 = vtanh.pop %v418
    %v421 = vrot.slane %v419, 1
    %v422 = vrot.slane %v419, 2
    %v423 = vrot.slane %v419, 3
    %v424 = vrot.slane %v419, 4
    %v425 = vrot.slane %v419, 5
    %v426 = vrot.slane %v419, 6
    %v427 = vrot.slane %v419, 7
    %435 = vst [vmem:[#allocation9 + $0x3] sm:$0x1] %v419
    %436 = vst [vmem:[#allocation9 + $0xb] sm:$0x1] %v421
    %437 = vst [vmem:[#allocation9 + $0x13] sm:$0x1] %v422
    %438 = vst [vmem:[#allocation9 + $0x1b] sm:$0x1] %v423
    %439 = vst [vmem:[#allocation9 + $0x23] sm:$0x1] %v424
    %440 = vst [vmem:[#allocation9 + $0x2b] sm:$0x1] %v425
    %441 = vst [vmem:[#allocation9 + $0x33] sm:$0x1] %v426
    %442 = vst [vmem:[#allocation9 + $0x3b] sm:$0x1] %v427
    %v443 = vrot.slane %v91, 4
    %v444 = vrot.slane %v92, 3
    %v445 = vsel %vm112, %v444, %v443
    %v446 = vrot.slane %v93, 2
    %v447 = vsel %vm115, %v446, %v445
    %v448 = vrot.slane %v94, 1
    %v449 = vsel %vm118, %v448, %v447
    %v450 = vsel %vm121, %v95, %v449
    %v451 = vrot.slane %v96, 7
    %v452 = vsel %vm124, %v451, %v450
    %v453 = vrot.slane %v97, 6
    %v454 = vsel %vm127, %v453, %v452
    %v455 = vrot.slane %v98, 5
    %v456 = vsel %vm130, %v455, %v454
    %v457 = vsel %vm132, %v456, 0
    %459 = vmatpush.msra.mxu0 0.0
    %460 = vmatpush.msra.mxu0 0.0
    %461 = vmatpush.msra.mxu0 0.0
    %462 = vmatpush.msra.mxu0 0.0
    %463 = vmatpush.msra.mxu0 0.0
    %464 = vmatpush.msra.mxu0 0.0
    %465 = vmatpush.msra.mxu0 0.0
    %466 = vmatpush.msra.mxu0 0.0
    %467 = vmatpush.msra.mxu0 0.0
    %468 = vmatpush.msra.mxu0 0.0
    %469 = vmatpush.msra.mxu0 0.0
    %470 = vmatpush.msra.mxu0 0.0
    %471 = vmatpush.msra.mxu0 %v73
    %472 = vmatpush.msra.mxu0 %v72
    %473 = vmatpush.msra.mxu0 %v71
    %474 = vmatpush.msra.mxu0 %v70
    %475 = vmatmul.f32.gmra.mxu0 %v457
    %v476 = vpop.f32.mrf.mxu0
    %v477 = vadd.f32 %v101, %v476
    %478 = vdwg.mxu0
    %479 = vmatpush.msra.mxu0 %v89
    %480 = vmatpush.msra.mxu0 %v88
    %481 = vmatpush.msra.mxu0 %v87
    %482 = vmatpush.msra.mxu0 %v86
    %483 = vmatpush.msra.mxu0 %v85
    %484 = vmatpush.msra.mxu0 %v84
    %485 = vmatpush.msra.mxu0 %v83
    %486 = vmatpush.msra.mxu0 %v82
    %487 = vmatpush.msra.mxu0 %v81
    %488 = vmatpush.msra.mxu0 %v80
    %489 = vmatpush.msra.mxu0 %v79
    %490 = vmatpush.msra.mxu0 %v78
    %491 = vmatpush.msra.mxu0 %v77
    %492 = vmatpush.msra.mxu0 %v76
    %493 = vmatpush.msra.mxu0 %v75
    %494 = vmatpush.msra.mxu0 %v74
    %495 = vmatmul.f32.gmra.mxu0 %v419
    %v496 = vpop.f32.mrf.mxu0
    %v497 = vadd.f32 0.0, %v496
    %498 = vdwg.mxu0
    %v499 = vadd.f32 %v477, %v497
    %v500 = vtanh.pop %v499
    %v502 = vrot.slane %v500, 1
    %v503 = vrot.slane %v500, 2
    %v504 = vrot.slane %v500, 3
    %v505 = vrot.slane %v500, 4
    %v506 = vrot.slane %v500, 5
    %v507 = vrot.slane %v500, 6
    %v508 = vrot.slane %v500, 7
    %516 = vst [vmem:[#allocation9 + $0x4] sm:$0x1] %v500
    %517 = vst [vmem:[#allocation9 + $0xc] sm:$0x1] %v502
    %518 = vst [vmem:[#allocation9 + $0x14] sm:$0x1] %v503
    %519 = vst [vmem:[#allocation9 + $0x1c] sm:$0x1] %v504
    %520 = vst [vmem:[#allocation9 + $0x24] sm:$0x1] %v505
    %521 = vst [vmem:[#allocation9 + $0x2c] sm:$0x1] %v506
    %522 = vst [vmem:[#allocation9 + $0x34] sm:$0x1] %v507
    %523 = vst [vmem:[#allocation9 + $0x3c] sm:$0x1] %v508
    %v524 = vrot.slane %v91, 5
    %v525 = vrot.slane %v92, 4
    %v526 = vsel %vm112, %v525, %v524
    %v527 = vrot.slane %v93, 3
    %v528 = vsel %vm115, %v527, %v526
    %v529 = vrot.slane %v94, 2
    %v530 = vsel %vm118, %v529, %v528
    %v531 = vrot.slane %v95, 1
    %v532 = vsel %vm121, %v531, %v530
    %v533 = vsel %vm124, %v96, %v532
    %v534 = vrot.slane %v97, 7
    %v535 = vsel %vm127, %v534, %v533
    %v536 = vrot.slane %v98, 6
    %v537 = vsel %vm130, %v536, %v535
    %v538 = vsel %vm132, %v537, 0
    %540 = vmatpush.msra.mxu0 0.0
    %541 = vmatpush.msra.mxu0 0.0
    %542 = vmatpush.msra.mxu0 0.0
    %543 = vmatpush.msra.mxu0 0.0
    %544 = vmatpush.msra.mxu0 0.0
    %545 = vmatpush.msra.mxu0 0.0
    %546 = vmatpush.msra.mxu0 0.0
    %547 = vmatpush.msra.mxu0 0.0
    %548 = vmatpush.msra.mxu0 0.0
    %549 = vmatpush.msra.mxu0 0.0
    %550 = vmatpush.msra.mxu0 0.0
    %551 = vmatpush.msra.mxu0 0.0
    %552 = vmatpush.msra.mxu0 %v73
    %553 = vmatpush.msra.mxu0 %v72
    %554 = vmatpush.msra.mxu0 %v71
    %555 = vmatpush.msra.mxu0 %v70
    %556 = vmatmul.f32.gmra.mxu0 %v538
    %v557 = vpop.f32.mrf.mxu0
    %v558 = vadd.f32 %v101, %v557
    %559 = vdwg.mxu0
    %560 = vmatpush.msra.mxu0 %v89
    %561 = vmatpush.msra.mxu0 %v88
    %562 = vmatpush.msra.mxu0 %v87
    %563 = vmatpush.msra.mxu0 %v86
    %564 = vmatpush.msra.mxu0 %v85
    %565 = vmatpush.msra.mxu0 %v84
    %566 = vmatpush.msra.mxu0 %v83
    %567 = vmatpush.msra.mxu0 %v82
    %568 = vmatpush.msra.mxu0 %v81
    %569 = vmatpush.msra.mxu0 %v80
    %570 = vmatpush.msra.mxu0 %v79
    %571 = vmatpush.msra.mxu0 %v78
    %572 = vmatpush.msra.mxu0 %v77
    %573 = vmatpush.msra.mxu0 %v76
    %574 = vmatpush.msra.mxu0 %v75
    %575 = vmatpush.msra.mxu0 %v74
    %576 = vmatmul.f32.gmra.mxu0 %v500
    %v577 = vpop.f32.mrf.mxu0
    %v578 = vadd.f32 0.0, %v577
    %579 = vdwg.mxu0
    %v580 = vadd.f32 %v558, %v578
    %v581 = vtanh.pop %v580
    %v583 = vrot.slane %v581, 1
    %v584 = vrot.slane %v581, 2
    %v585 = vrot.slane %v581, 3
    %v586 = vrot.slane %v581, 4
    %v587 = vrot.slane %v581, 5
    %v588 = vrot.slane %v581, 6
    %v589 = vrot.slane %v581, 7
    %597 = vst [vmem:[#allocation9 + $0x5] sm:$0x1] %v581
    %598 = vst [vmem:[#allocation9 + $0xd] sm:$0x1] %v583
    %599 = vst [vmem:[#allocation9 + $0x15] sm:$0x1] %v584
    %600 = vst [vmem:[#allocation9 + $0x1d] sm:$0x1] %v585
    %601 = vst [vmem:[#allocation9 + $0x25] sm:$0x1] %v586
    %602 = vst [vmem:[#allocation9 + $0x2d] sm:$0x1] %v587
    %603 = vst [vmem:[#allocation9 + $0x35] sm:$0x1] %v588
    %604 = vst [vmem:[#allocation9 + $0x3d] sm:$0x1] %v589
    %v605 = vrot.slane %v91, 6
    %v606 = vrot.slane %v92, 5
    %v607 = vsel %vm112, %v606, %v605
    %v608 = vrot.slane %v93, 4
    %v609 = vsel %vm115, %v608, %v607
    %v610 = vrot.slane %v94, 3
    %v611 = vsel %vm118, %v610, %v609
    %v612 = vrot.slane %v95, 2
    %v613 = vsel %vm121, %v612, %v611
    %v614 = vrot.slane %v96, 1
    %v615 = vsel %vm124, %v614, %v613
    %v616 = vsel %vm127, %v97, %v615
    %v617 = vrot.slane %v98, 7
    %v618 = vsel %vm130, %v617, %v616
    %v619 = vsel %vm132, %v618, 0
    %621 = vmatpush.msra.mxu0 0.0
    %622 = vmatpush.msra.mxu0 0.0
    %623 = vmatpush.msra.mxu0 0.0
    %624 = vmatpush.msra.mxu0 0.0
    %625 = vmatpush.msra.mxu0 0.0
    %626 = vmatpush.msra.mxu0 0.0
    %627 = vmatpush.msra.mxu0 0.0
    %628 = vmatpush.msra.mxu0 0.0
    %629 = vmatpush.msra.mxu0 0.0
    %630 = vmatpush.msra.mxu0 0.0
    %631 = vmatpush.msra.mxu0 0.0
    %632 = vmatpush.msra.mxu0 0.0
    %633 = vmatpush.msra.mxu0 %v73
    %634 = vmatpush.msra.mxu0 %v72
    %635 = vmatpush.msra.mxu0 %v71
    %636 = vmatpush.msra.mxu0 %v70
    %637 = vmatmul.f32.gmra.mxu0 %v619
    %v638 = vpop.f32.mrf.mxu0
    %v639 = vadd.f32 %v101, %v638
    %640 = vdwg.mxu0
    %641 = vmatpush.msra.mxu0 %v89
    %642 = vmatpush.msra.mxu0 %v88
    %643 = vmatpush.msra.mxu0 %v87
    %644 = vmatpush.msra.mxu0 %v86
    %645 = vmatpush.msra.mxu0 %v85
    %646 = vmatpush.msra.mxu0 %v84
    %647 = vmatpush.msra.mxu0 %v83
    %648 = vmatpush.msra.mxu0 %v82
    %649 = vmatpush.msra.mxu0 %v81
    %650 = vmatpush.msra.mxu0 %v80
    %651 = vmatpush.msra.mxu0 %v79
    %652 = vmatpush.msra.mxu0 %v78
    %653 = vmatpush.msra.mxu0 %v77
    %654 = vmatpush.msra.mxu0 %v76
    %655 = vmatpush.msra.mxu0 %v75
    %656 = vmatpush.msra.mxu0 %v74
    %657 = vmatmul.f32.gmra.mxu0 %v581
    %v658 = vpop.f32.mrf.mxu0
    %v659 = vadd.f32 0.0, %v658
    %660 = vdwg.mxu0
    %v661 = vadd.f32 %v639, %v659
    %v662 = vtanh.pop %v661
    %v664 = vrot.slane %v662, 1
    %v665 = vrot.slane %v662, 2
    %v666 = vrot.slane %v662, 3
    %v667 = vrot.slane %v662, 4
    %v668 = vrot.slane %v662, 5
    %v669 = vrot.slane %v662, 6
    %v670 = vrot.slane %v662, 7
    %678 = vst [vmem:[#allocation9 + $0x6] sm:$0x1] %v662
    %679 = vst [vmem:[#allocation9 + $0xe] sm:$0x1] %v664
    %680 = vst [vmem:[#allocation9 + $0x16] sm:$0x1] %v665
    %681 = vst [vmem:[#allocation9 + $0x1e] sm:$0x1] %v666
    %682 = vst [vmem:[#allocation9 + $0x26] sm:$0x1] %v667
    %683 = vst [vmem:[#allocation9 + $0x2e] sm:$0x1] %v668
    %684 = vst [vmem:[#allocation9 + $0x36] sm:$0x1] %v669
    %685 = vst [vmem:[#allocation9 + $0x3e] sm:$0x1] %v670
    %v686 = vrot.slane %v91, 7
    %v687 = vrot.slane %v92, 6
    %v688 = vsel %vm112, %v687, %v686
    %v689 = vrot.slane %v93, 5
    %v690 = vsel %vm115, %v689, %v688
    %v691 = vrot.slane %v94, 4
    %v692 = vsel %vm118, %v691, %v690
    %v693 = vrot.slane %v95, 3
    %v694 = vsel %vm121, %v693, %v692
    %v695 = vrot.slane %v96, 2
    %v696 = vsel %vm124, %v695, %v694
    %v697 = vrot.slane %v97, 1
    %v698 = vsel %vm127, %v697, %v696
    %v699 = vsel %vm130, %v98, %v698
    %v700 = vsel %vm132, %v699, 0
    %702 = vmatpush.msra.mxu0 0.0
    %703 = vmatpush.msra.mxu0 0.0
    %704 = vmatpush.msra.mxu0 0.0
    %705 = vmatpush.msra.mxu0 0.0
    %706 = vmatpush.msra.mxu0 0.0
    %707 = vmatpush.msra.mxu0 0.0
    %708 = vmatpush.msra.mxu0 0.0
    %709 = vmatpush.msra.mxu0 0.0
    %710 = vmatpush.msra.mxu0 0.0
    %711 = vmatpush.msra.mxu0 0.0
    %712 = vmatpush.msra.mxu0 0.0
    %713 = vmatpush.msra.mxu0 0.0
    %714 = vmatpush.msra.mxu0 %v73
    %715 = vmatpush.msra.mxu0 %v72
    %716 = vmatpush.msra.mxu0 %v71
    %717 = vmatpush.msra.mxu0 %v70
    %718 = vmatmul.f32.gmra.mxu0 %v700
    %v719 = vpop.f32.mrf.mxu0
    %v720 = vadd.f32 %v101, %v719
    %721 = vdwg.mxu0
    %722 = vmatpush.msra.mxu0 %v89
    %723 = vmatpush.msra.mxu0 %v88
    %724 = vmatpush.msra.mxu0 %v87
    %725 = vmatpush.msra.mxu0 %v86
    %726 = vmatpush.msra.mxu0 %v85
    %727 = vmatpush.msra.mxu0 %v84
    %728 = vmatpush.msra.mxu0 %v83
    %729 = vmatpush.msra.mxu0 %v82
    %730 = vmatpush.msra.mxu0 %v81
    %731 = vmatpush.msra.mxu0 %v80
    %732 = vmatpush.msra.mxu0 %v79
    %733 = vmatpush.msra.mxu0 %v78
    %734 = vmatpush.msra.mxu0 %v77
    %735 = vmatpush.msra.mxu0 %v76
    %736 = vmatpush.msra.mxu0 %v75
    %737 = vmatpush.msra.mxu0 %v74
    %738 = vmatmul.f32.gmra.mxu0 %v662
    %v739 = vpop.f32.mrf.mxu0
    %v740 = vadd.f32 0.0, %v739
    %741 = vdwg.mxu0
    %v742 = vadd.f32 %v720, %v740
    %v743 = vtanh.pop %v742
    %v745 = vrot.slane %v743, 1
    %v746 = vrot.slane %v743, 2
    %v747 = vrot.slane %v743, 3
    %v748 = vrot.slane %v743, 4
    %v749 = vrot.slane %v743, 5
    %v750 = vrot.slane %v743, 6
    %v751 = vrot.slane %v743, 7
    %759 = vst [vmem:[#allocation9 + $0x7] sm:$0x1] %v743
    %760 = vst [vmem:[#allocation9 + $0xf] sm:$0x1] %v745
    %761 = vst [vmem:[#allocation9 + $0x17] sm:$0x1] %v746
    %762 = vst [vmem:[#allocation9 + $0x1f] sm:$0x1] %v747
    %763 = vst [vmem:[#allocation9 + $0x27] sm:$0x1] %v748
    %764 = vst [vmem:[#allocation9 + $0x2f] sm:$0x1] %v749
    %765 = vst [vmem:[#allocation9 + $0x37] sm:$0x1] %v750
    %766 = vst [vmem:[#allocation9 + $0x3f] sm:$0x1] %v751
    %767 = vst [vmem:[#allocation2] sm:$0xff] %v743
    // Predicated region
    $region34: #{tpu_custom_call.1} parent=1 // pred_check
      _
    $region35: #{tpu_custom_call.1} parent=1 // pred_check_branch
      %769 = sbr.rel (0) target = $region37
    $region36: #{tpu_custom_call.1} parent=1 // pred_region
      %771 = vsyncadd [#allocation5], 0
      %s772 = sshll.u32 [#allocation9], 4
      %s773 = int_to_ptr.vmem [resolvable:$true] %s772
      %s774 = sshll.u32 %s4, 4
      %s775 = int_to_ptr.hbm [resolvable:$true] %s774
      %780 = dma.vmem_to_hbm [thread:$0]  %s773, 1024, %s775, [#allocation5], 128, 128, 8
    $region37: #{tpu_custom_call.1} parent=1 // pred_fallthru
      _
    // Predicated region
    $region38: #{tpu_custom_call.1} parent=1 // pred_check
      _
    $region39: #{tpu_custom_call.1} parent=1 // pred_check_branch
      %782 = sbr.rel (0) target = $region41
    $region40: #{tpu_custom_call.1} parent=1 // pred_region
      %784 = dma.done [#allocation5], 1024
    $region41: #{tpu_custom_call.1} parent=1 // pred_fallthru
      _
    %785 = vsyncpa [#allocation4], 1
    %786 = vsyncpa [#allocation7], 1
    %787 = vsyncpa [#allocation5], 1

</llo_original>
